<compile_context>
chip_gen: v6e
topology: v6e:2x2x1
jax: 0.10.0
libtpu: 0.0.40
codegen_flags: <defaults>
</compile_context>

<pallas_src>
import functools

import jax
import jax.numpy as jnp
from jax.experimental import pallas as pl
from jax.experimental.pallas import tpu as pltpu


def cnn_encoder_kernel(*refs, widths, seq_len, batch, vocab, emb_dim, filt,
                       hidden, pad_max):
    """refs = [tokens, emb_table] + [conv_w_i, conv_b_i]*n + [wh, bh, out, emb_pad_scratch]."""
    n = len(widths)
    tok_ref, table_ref = refs[0], refs[1]
    conv_refs = [(refs[2 + 2 * i], refs[3 + 2 * i]) for i in range(n)]
    wh_ref, bh_ref = refs[2 + 2 * n], refs[3 + 2 * n]
    out_ref = refs[4 + 2 * n]
    emb_pad_ref = refs[5 + 2 * n]

    bt = batch * seq_len
    t_pad = seq_len + 2 * pad_max

    # ---- fused embedding lookup: one-hot (B*T, V) @ table (V, C) on the MXU ----
    tok = tok_ref[...]                                            # (B*T, 1) int32, batch-major
    iota = jax.lax.broadcasted_iota(jnp.int32, (bt, vocab), 1)
    onehot = jnp.where(iota == tok, 1.0, 0.0).astype(jnp.bfloat16)
    emb = jnp.dot(onehot, table_ref[...], preferred_element_type=jnp.float32)
    emb = emb.astype(jnp.bfloat16).reshape(batch, seq_len, emb_dim)

    # ---- single shared zero-padded embedding (time axis), built once in VMEM ----
    emb_pad_ref[...] = jnp.zeros_like(emb_pad_ref)
    emb_pad_ref[:, pad_max:pad_max + seq_len, :] = emb
    flat = emb_pad_ref[...].reshape(batch * t_pad, emb_dim)       # (B*T_pad, C) bf16

    # ---- per width: conv (batched-M matmul per tap) -> ReLU -> max-pool -> fused Linear ----
    h = jnp.zeros((batch, hidden), jnp.float32)
    for wi, ((w_ref, b_ref), w) in enumerate(zip(conv_refs, widths)):
        t_out = seq_len + w - 1                                   # Conv1d(padding=w-1) out length
        start = pad_max - (w - 1)                                 # window offset in shared pad frame
        acc = None
        for k in range(w):                                        # static unroll over filter taps
            y = jnp.dot(flat, w_ref[k], preferred_element_type=jnp.float32)
            y = y.reshape(batch, t_pad, filt)[:, start + k:start + k + t_out, :]
            acc = y if acc is None else acc + y
        acc = jnp.maximum(acc + b_ref[...].reshape(1, 1, filt), 0.0)   # bias + ReLU (f32)
        pooled = jnp.max(acc, axis=1)                             # AdaptiveMaxPool1d(1) -> (B, F)
        h = h + jnp.dot(pooled.astype(jnp.bfloat16),
                        wh_ref[wi * filt:(wi + 1) * filt, :],
                        preferred_element_type=jnp.float32)       # fused Linear, no concat

    out_ref[...] = jnp.tanh(h + bh_ref[...])                      # (B, H); Dropout = identity (eval)


def cnn_encoder_forward(tokens, embedding, conv_ws, conv_bs, wh, bh, widths):
    """tokens: (T, B) int32; embedding: (V, C); conv_ws[i]: (F, C, w_i) torch layout;
    conv_bs[i]: (F,); wh: (n_widths*F, H); bh: (H,). Returns (B, H) float32."""
    T, B = tokens.shape
    V, C = embedding.shape
    widths = tuple(int(w) for w in widths)
    F_ = conv_ws[0].shape[0]
    H = wh.shape[1]
    pad_max = max(widths) - 1
    t_pad = T + 2 * pad_max

    # tiny int reorder only; the embedding gather itself happens inside the kernel
    tok_bt = jnp.transpose(tokens, (1, 0)).reshape(B * T, 1).astype(jnp.int32)

    inputs = [tok_bt, embedding.astype(jnp.bfloat16)]
    for cw, cb in zip(conv_ws, conv_bs):
        inputs += [jnp.transpose(cw, (2, 1, 0)).astype(jnp.bfloat16),   # (w, C, F)
                   cb.reshape(1, -1).astype(jnp.float32)]
    inputs += [wh.astype(jnp.bfloat16), bh.reshape(1, -1).astype(jnp.float32)]

    kernel = functools.partial(cnn_encoder_kernel, widths=widths, seq_len=T,
                               batch=B, vocab=V, emb_dim=C, filt=F_, hidden=H,
                               pad_max=pad_max)
    vmem = pl.BlockSpec(memory_space=pltpu.MemorySpace.VMEM)
    out = pl.pallas_call(
        kernel,
        out_shape=jax.ShapeDtypeStruct((B, H), jnp.float32),
        in_specs=[vmem] * len(inputs),
        out_specs=vmem,
        scratch_shapes=[pltpu.VMEM((B, t_pad, C), jnp.bfloat16)],
    )(*inputs)
    return out


def reference_forward(tokens, embedding, conv_ws, conv_bs, wh, bh, widths):
    """Pure-JAX f32 reference mirroring the PyTorch forward (NCL conv layout)."""
    emb = embedding[tokens]                                 # (T, B, C)
    x = jnp.transpose(emb, (1, 2, 0)).astype(jnp.float32)   # (B, C, T)
    feats = []
    for cw, cb, w in zip(conv_ws, conv_bs, widths):
        y = jax.lax.conv_general_dilated(
            x, cw.astype(jnp.float32), window_strides=(1,), padding=[(w - 1, w - 1)],
            dimension_numbers=("NCH", "OIH", "NCH"))
        y = jnp.maximum(y + cb[None, :, None], 0.0)
        feats.append(jnp.max(y, axis=2))
    xcat = jnp.concatenate(feats, axis=1)
    return jnp.tanh(xcat @ wh + bh)


if __name__ == "__main__":
    key = jax.random.PRNGKey(0)
    V, C, T, B = 32, 16, 12, 4          # vocab, input_size (embed dim), seq_len, batch
    F_, H = 8, 16                       # filter_nums, hidden_size
    widths = (2, 3)                     # filter_widths

    ks = jax.random.split(key, 8)
    embedding = jax.random.normal(ks[0], (V, C), jnp.float32) * 0.1
    conv_ws = [jax.random.normal(ks[1 + i], (F_, C, w), jnp.float32) * 0.2
               for i, w in enumerate(widths)]
    conv_bs = [jax.random.normal(ks[3 + i], (F_,), jnp.float32) * 0.1
               for i in range(len(widths))]
    wh = jax.random.normal(ks[5], (len(widths) * F_, H), jnp.float32) * 0.2
    bh = jax.random.normal(ks[6], (H,), jnp.float32) * 0.1
    tokens = jax.random.randint(ks[7], (T, B), 0, V, dtype=jnp.int32)

    out = cnn_encoder_forward(tokens, embedding, conv_ws, conv_bs, wh, bh, widths)
    out = jax.block_until_ready(out)

    ref = reference_forward(tokens, embedding, conv_ws, conv_bs, wh, bh, widths)
    assert out.shape == (B, H), out.shape
    assert jnp.allclose(out, ref, rtol=1e-2, atol=1e-2), (out, ref)
    print("KERNEL_OK")
</pallas_src>

<mosaic_0001>
module attributes {stable_mosaic.version = 11 : i64} {
  func.func @cnn_encoder_kernel(%arg0: memref<48x1xi32, #tpu.memory_space<vmem>>, %arg1: memref<32x16xbf16, #tpu.memory_space<vmem>>, %arg2: memref<2x16x8xbf16, #tpu.memory_space<vmem>>, %arg3: memref<1x8xf32, #tpu.memory_space<vmem>>, %arg4: memref<3x16x8xbf16, #tpu.memory_space<vmem>>, %arg5: memref<1x8xf32, #tpu.memory_space<vmem>>, %arg6: memref<16x16xbf16, #tpu.memory_space<vmem>>, %arg7: memref<1x16xf32, #tpu.memory_space<vmem>>, %arg8: memref<4x16xf32, #tpu.memory_space<vmem>>, %arg9: memref<4x16x16xbf16, #tpu.memory_space<vmem>>) attributes {dimension_semantics = [], scalar_prefetch = 0 : i64, scratch_operands = 1 : i64, tpu.core_type = #tpu.core_type<tc>} {
    %c0 = arith.constant 0 : index
    %c0_0 = arith.constant 0 : index
    %0 = vector.load %arg0[%c0, %c0_0] : memref<48x1xi32, #tpu.memory_space<vmem>>, vector<48x1xi32>
    %1 = tpu.iota {dimensions = array<i32: 1>} : vector<48x32xi32>
    %2 = vector.broadcast %0 : vector<48x1xi32> to vector<48x32xi32>
    %3 = arith.cmpi eq, %1, %2 : vector<48x32xi32>
    %cst = arith.constant 1.000000e+00 : f32
    %cst_1 = arith.constant 0.000000e+00 : f32
    %4 = vector.broadcast %cst : f32 to vector<48x32xf32>
    %5 = vector.broadcast %cst_1 : f32 to vector<48x32xf32>
    %6 = arith.select %3, %4, %5 : vector<48x32xi1>, vector<48x32xf32>
    %7 = arith.truncf %6 : vector<48x32xf32> to vector<48x32xbf16>
    %c0_2 = arith.constant 0 : index
    %c0_3 = arith.constant 0 : index
    %8 = vector.load %arg1[%c0_2, %c0_3] : memref<32x16xbf16, #tpu.memory_space<vmem>>, vector<32x16xbf16>
    %cst_4 = arith.constant dense<0.000000e+00> : vector<48x16xf32>
    %9 = tpu.matmul %7, %8, %cst_4 {dimension_numbers = #tpu.dot_dimension_numbers<[1], [0], [0], [1], [0, 0, 1, 1], [], []>} : vector<48x32xbf16>, vector<32x16xbf16>, vector<48x16xf32> -> vector<48x16xf32>
    %10 = arith.truncf %9 : vector<48x16xf32> to vector<48x16xbf16>
    %11 = vector.shape_cast %10 : vector<48x16xbf16> to vector<4x12x16xbf16>
    %cst_5 = arith.constant 0.000000e+00 : bf16
    %12 = vector.broadcast %cst_5 : bf16 to vector<4x16x16xbf16>
    %c0_6 = arith.constant 0 : index
    %c0_7 = arith.constant 0 : index
    %c0_8 = arith.constant 0 : index
    %13 = vector.load %arg9[%c0_6, %c0_7, %c0_8] : memref<4x16x16xbf16, #tpu.memory_space<vmem>>, vector<4x16x16xbf16>
    tpu.vector_store %arg9[%c0_6, %c0_7, %c0_8], %12 {strides = array<i32>} : memref<4x16x16xbf16, #tpu.memory_space<vmem>>, vector<4x16x16xbf16>,
    %c0_9 = arith.constant 0 : index
    %c2 = arith.constant 2 : index
    %c0_10 = arith.constant 0 : index
    %14 = vector.load %arg9[%c0_9, %c2, %c0_10] : memref<4x16x16xbf16, #tpu.memory_space<vmem>>, vector<4x12x16xbf16>
    tpu.vector_store %arg9[%c0_9, %c2, %c0_10], %11 {strides = array<i32>} : memref<4x16x16xbf16, #tpu.memory_space<vmem>>, vector<4x12x16xbf16>,
    %c0_11 = arith.constant 0 : index
    %c0_12 = arith.constant 0 : index
    %c0_13 = arith.constant 0 : index
    %15 = vector.load %arg9[%c0_11, %c0_12, %c0_13] : memref<4x16x16xbf16, #tpu.memory_space<vmem>>, vector<4x16x16xbf16>
    %16 = vector.shape_cast %15 : vector<4x16x16xbf16> to vector<64x16xbf16>
    %cst_14 = arith.constant 0.000000e+00 : f32
    %17 = vector.broadcast %cst_14 : f32 to vector<4x16xf32>
    %c0_15 = arith.constant 0 : index
    %c0_16 = arith.constant 0 : index
    %c0_17 = arith.constant 0 : index
    %18 = vector.load %arg2[%c0_15, %c0_16, %c0_17] : memref<2x16x8xbf16, #tpu.memory_space<vmem>>, vector<1x16x8xbf16>
    %19 = vector.shape_cast %18 : vector<1x16x8xbf16> to vector<16x8xbf16>
    %cst_18 = arith.constant dense<0.000000e+00> : vector<64x8xf32>
    %20 = tpu.matmul %16, %19, %cst_18 {dimension_numbers = #tpu.dot_dimension_numbers<[1], [0], [0], [1], [0, 0, 1, 1], [], []>} : vector<64x16xbf16>, vector<16x8xbf16>, vector<64x8xf32> -> vector<64x8xf32>
    %21 = vector.shape_cast %20 : vector<64x8xf32> to vector<4x16x8xf32>
    %22 = vector.extract_strided_slice %21 {offsets = [0, 1, 0], sizes = [4, 13, 8], strides = [1, 1, 1]} : vector<4x16x8xf32> to vector<4x13x8xf32>
    %c1 = arith.constant 1 : index
    %c0_19 = arith.constant 0 : index
    %c0_20 = arith.constant 0 : index
    %23 = vector.load %arg2[%c1, %c0_19, %c0_20] : memref<2x16x8xbf16, #tpu.memory_space<vmem>>, vector<1x16x8xbf16>
    %24 = vector.shape_cast %23 : vector<1x16x8xbf16> to vector<16x8xbf16>
    %cst_21 = arith.constant dense<0.000000e+00> : vector<64x8xf32>
    %25 = tpu.matmul %16, %24, %cst_21 {dimension_numbers = #tpu.dot_dimension_numbers<[1], [0], [0], [1], [0, 0, 1, 1], [], []>} : vector<64x16xbf16>, vector<16x8xbf16>, vector<64x8xf32> -> vector<64x8xf32>
    %26 = vector.shape_cast %25 : vector<64x8xf32> to vector<4x16x8xf32>
    %27 = vector.extract_strided_slice %26 {offsets = [0, 2, 0], sizes = [4, 13, 8], strides = [1, 1, 1]} : vector<4x16x8xf32> to vector<4x13x8xf32>
    %28 = arith.addf %22, %27 : vector<4x13x8xf32>
    %c0_22 = arith.constant 0 : index
    %c0_23 = arith.constant 0 : index
    %29 = vector.load %arg3[%c0_22, %c0_23] : memref<1x8xf32, #tpu.memory_space<vmem>>, vector<1x8xf32>
    %30 = vector.shape_cast %29 : vector<1x8xf32> to vector<1x1x8xf32>
    %31 = vector.broadcast %30 : vector<1x1x8xf32> to vector<4x13x8xf32>
    %32 = arith.addf %28, %31 : vector<4x13x8xf32>
    %cst_24 = arith.constant 0.000000e+00 : f32
    %33 = vector.broadcast %cst_24 : f32 to vector<4x13x8xf32>
    %34 = arith.maximumf %32, %33 : vector<4x13x8xf32>
    %cst_25 = arith.constant dense<0xFF800000> : vector<4x8xf32>
    %35 = vector.multi_reduction <maximumf>, %34, %cst_25 [1] : vector<4x13x8xf32> to vector<4x8xf32>
    %36 = arith.truncf %35 : vector<4x8xf32> to vector<4x8xbf16>
    %c0_26 = arith.constant 0 : index
    %c0_27 = arith.constant 0 : index
    %37 = vector.load %arg6[%c0_26, %c0_27] : memref<16x16xbf16, #tpu.memory_space<vmem>>, vector<8x16xbf16>
    %cst_28 = arith.constant dense<0.000000e+00> : vector<4x16xf32>
    %38 = tpu.matmul %36, %37, %cst_28 {dimension_numbers = #tpu.dot_dimension_numbers<[1], [0], [0], [1], [0, 0, 1, 1], [], []>} : vector<4x8xbf16>, vector<8x16xbf16>, vector<4x16xf32> -> vector<4x16xf32>
    %39 = arith.addf %17, %38 : vector<4x16xf32>
    %c0_29 = arith.constant 0 : index
    %c0_30 = arith.constant 0 : index
    %c0_31 = arith.constant 0 : index
    %40 = vector.load %arg4[%c0_29, %c0_30, %c0_31] : memref<3x16x8xbf16, #tpu.memory_space<vmem>>, vector<1x16x8xbf16>
    %41 = vector.shape_cast %40 : vector<1x16x8xbf16> to vector<16x8xbf16>
    %cst_32 = arith.constant dense<0.000000e+00> : vector<64x8xf32>
    %42 = tpu.matmul %16, %41, %cst_32 {dimension_numbers = #tpu.dot_dimension_numbers<[1], [0], [0], [1], [0, 0, 1, 1], [], []>} : vector<64x16xbf16>, vector<16x8xbf16>, vector<64x8xf32> -> vector<64x8xf32>
    %43 = vector.shape_cast %42 : vector<64x8xf32> to vector<4x16x8xf32>
    %44 = vector.extract_strided_slice %43 {offsets = [0, 0, 0], sizes = [4, 14, 8], strides = [1, 1, 1]} : vector<4x16x8xf32> to vector<4x14x8xf32>
    %c1_33 = arith.constant 1 : index
    %c0_34 = arith.constant 0 : index
    %c0_35 = arith.constant 0 : index
    %45 = vector.load %arg4[%c1_33, %c0_34, %c0_35] : memref<3x16x8xbf16, #tpu.memory_space<vmem>>, vector<1x16x8xbf16>
    %46 = vector.shape_cast %45 : vector<1x16x8xbf16> to vector<16x8xbf16>
    %cst_36 = arith.constant dense<0.000000e+00> : vector<64x8xf32>
    %47 = tpu.matmul %16, %46, %cst_36 {dimension_numbers = #tpu.dot_dimension_numbers<[1], [0], [0], [1], [0, 0, 1, 1], [], []>} : vector<64x16xbf16>, vector<16x8xbf16>, vector<64x8xf32> -> vector<64x8xf32>
    %48 = vector.shape_cast %47 : vector<64x8xf32> to vector<4x16x8xf32>
    %49 = vector.extract_strided_slice %48 {offsets = [0, 1, 0], sizes = [4, 14, 8], strides = [1, 1, 1]} : vector<4x16x8xf32> to vector<4x14x8xf32>
    %50 = arith.addf %44, %49 : vector<4x14x8xf32>
    %c2_37 = arith.constant 2 : index
    %c0_38 = arith.constant 0 : index
    %c0_39 = arith.constant 0 : index
    %51 = vector.load %arg4[%c2_37, %c0_38, %c0_39] : memref<3x16x8xbf16, #tpu.memory_space<vmem>>, vector<1x16x8xbf16>
    %52 = vector.shape_cast %51 : vector<1x16x8xbf16> to vector<16x8xbf16>
    %cst_40 = arith.constant dense<0.000000e+00> : vector<64x8xf32>
    %53 = tpu.matmul %16, %52, %cst_40 {dimension_numbers = #tpu.dot_dimension_numbers<[1], [0], [0], [1], [0, 0, 1, 1], [], []>} : vector<64x16xbf16>, vector<16x8xbf16>, vector<64x8xf32> -> vector<64x8xf32>
    %54 = vector.shape_cast %53 : vector<64x8xf32> to vector<4x16x8xf32>
    %55 = vector.extract_strided_slice %54 {offsets = [0, 2, 0], sizes = [4, 14, 8], strides = [1, 1, 1]} : vector<4x16x8xf32> to vector<4x14x8xf32>
    %56 = arith.addf %50, %55 : vector<4x14x8xf32>
    %c0_41 = arith.constant 0 : index
    %c0_42 = arith.constant 0 : index
    %57 = vector.load %arg5[%c0_41, %c0_42] : memref<1x8xf32, #tpu.memory_space<vmem>>, vector<1x8xf32>
    %58 = vector.shape_cast %57 : vector<1x8xf32> to vector<1x1x8xf32>
    %59 = vector.broadcast %58 : vector<1x1x8xf32> to vector<4x14x8xf32>
    %60 = arith.addf %56, %59 : vector<4x14x8xf32>
    %cst_43 = arith.constant 0.000000e+00 : f32
    %61 = vector.broadcast %cst_43 : f32 to vector<4x14x8xf32>
    %62 = arith.maximumf %60, %61 : vector<4x14x8xf32>
    %cst_44 = arith.constant dense<0xFF800000> : vector<4x8xf32>
    %63 = vector.multi_reduction <maximumf>, %62, %cst_44 [1] : vector<4x14x8xf32> to vector<4x8xf32>
    %64 = arith.truncf %63 : vector<4x8xf32> to vector<4x8xbf16>
    %c8 = arith.constant 8 : index
    %c0_45 = arith.constant 0 : index
    %65 = vector.load %arg6[%c8, %c0_45] : memref<16x16xbf16, #tpu.memory_space<vmem>>, vector<8x16xbf16>
    %cst_46 = arith.constant dense<0.000000e+00> : vector<4x16xf32>
    %66 = tpu.matmul %64, %65, %cst_46 {dimension_numbers = #tpu.dot_dimension_numbers<[1], [0], [0], [1], [0, 0, 1, 1], [], []>} : vector<4x8xbf16>, vector<8x16xbf16>, vector<4x16xf32> -> vector<4x16xf32>
    %67 = arith.addf %39, %66 : vector<4x16xf32>
    %c0_47 = arith.constant 0 : index
    %c0_48 = arith.constant 0 : index
    %68 = vector.load %arg7[%c0_47, %c0_48] : memref<1x16xf32, #tpu.memory_space<vmem>>, vector<1x16xf32>
    %69 = vector.broadcast %68 : vector<1x16xf32> to vector<4x16xf32>
    %70 = arith.addf %67, %69 : vector<4x16xf32>
    %71 = math.tanh %70 : vector<4x16xf32>
    %c0_49 = arith.constant 0 : index
    %c0_50 = arith.constant 0 : index
    %72 = vector.load %arg8[%c0_49, %c0_50] : memref<4x16xf32, #tpu.memory_space<vmem>>, vector<4x16xf32>
    tpu.vector_store %arg8[%c0_49, %c0_50], %71 {strides = array<i32>} : memref<4x16xf32, #tpu.memory_space<vmem>>, vector<4x16xf32>,
    return
  }
}

</mosaic_0001>

<llo_original>
// kernel: tpu_custom_call.1
$region0: #{tpu_custom_call.1}
  #allocation0 [shape = 'u32[]', space=smem, size = 0x4, offset = 0x4, fixed_abs, tag = 'smem constant byte address 0x4 - core index']
  #allocation1 [shape = 'u32[144,128]{1,0:T(1,128)}', space=vmem, size = 0x12000, scoped, tag = 'internal scratch']
  #allocation2 [shape = 'bf16[4,16,16]{2,1,0:T(8,128)(2,1)}', space=vmem, size = 0x4000, scoped, tag = 'scratch operand']
  %s0 = inlined_call_operand.vmem [shape: s32[48,1], index: 0, kind: input, shape index: {}]
  %s1 = inlined_call_operand.vmem [shape: bf16[32,16], index: 1, kind: input, shape index: {}]
  %s2 = inlined_call_operand.vmem [shape: bf16[2,16,8], index: 2, kind: input, shape index: {}]
  %s3 = inlined_call_operand.vmem [shape: f32[1,8], index: 3, kind: input, shape index: {}]
  %s4 = inlined_call_operand.vmem [shape: bf16[3,16,8], index: 4, kind: input, shape index: {}]
  %s5 = inlined_call_operand.vmem [shape: f32[1,8], index: 5, kind: input, shape index: {}]
  %s6 = inlined_call_operand.vmem [shape: bf16[16,16], index: 6, kind: input, shape index: {}]
  %s7 = inlined_call_operand.vmem [shape: f32[1,16], index: 7, kind: input, shape index: {}]
  %s8 = inlined_call_operand.hbm [shape: f32[4,16], index: 8, kind: output, shape index: {}]
  %s9 = sld [smem:[#allocation0]]
  $region42: #{tpu_custom_call.1} parent=0
    _
  %s11 = ssub.s32 1, %s9
  %s12 = scalar_select 0, %s11, %s9
  $region1: #{tpu_custom_call.1} parent=0
    #allocation3 [shape = 'u8[2048]{0}', space=vmem, size = 0x800, scoped, tag = 'output window, operand 0, single buffered']
    #allocation4 [shape = 's32[1]{0}', space=sflag, size = 0x4, scoped, tag = 'scoped memory for tpu_custom_call.1']
    %13 = vsyncpa [#allocation4], 0
    // Predicated region
    $region2: #{tpu_custom_call.1} parent=1 // pred_check
      _
    $region3: #{tpu_custom_call.1} parent=1 // pred_check_branch
      %15 = sbr.rel (0) target = $region5
    $region4: #{tpu_custom_call.1} parent=1 // pred_region
      _
    $region5: #{tpu_custom_call.1} parent=1 // pred_fallthru
      _
    // Predicated region
    $region6: #{tpu_custom_call.1} parent=1 // pred_check
      _
    $region7: #{tpu_custom_call.1} parent=1 // pred_check_branch
      %17 = sbr.rel (0) target = $region9
    $region8: #{tpu_custom_call.1} parent=1 // pred_region
      _
    $region9: #{tpu_custom_call.1} parent=1 // pred_fallthru
      _
    // Predicated region
    $region10: #{tpu_custom_call.1} parent=1 // pred_check
      _
    $region11: #{tpu_custom_call.1} parent=1 // pred_check_branch
      %19 = sbr.rel (0) target = $region13
    $region12: #{tpu_custom_call.1} parent=1 // pred_region
      _
    $region13: #{tpu_custom_call.1} parent=1 // pred_fallthru
      _
    // Predicated region
    $region14: #{tpu_custom_call.1} parent=1 // pred_check
      _
    $region15: #{tpu_custom_call.1} parent=1 // pred_check_branch
      %21 = sbr.rel (0) target = $region17
    $region16: #{tpu_custom_call.1} parent=1 // pred_region
      _
    $region17: #{tpu_custom_call.1} parent=1 // pred_fallthru
      _
    // Predicated region
    $region18: #{tpu_custom_call.1} parent=1 // pred_check
      _
    $region19: #{tpu_custom_call.1} parent=1 // pred_check_branch
      %23 = sbr.rel (0) target = $region21
    $region20: #{tpu_custom_call.1} parent=1 // pred_region
      _
    $region21: #{tpu_custom_call.1} parent=1 // pred_fallthru
      _
    // Predicated region
    $region22: #{tpu_custom_call.1} parent=1 // pred_check
      _
    $region23: #{tpu_custom_call.1} parent=1 // pred_check_branch
      %25 = sbr.rel (0) target = $region25
    $region24: #{tpu_custom_call.1} parent=1 // pred_region
      _
    $region25: #{tpu_custom_call.1} parent=1 // pred_fallthru
      _
    // Predicated region
    $region26: #{tpu_custom_call.1} parent=1 // pred_check
      _
    $region27: #{tpu_custom_call.1} parent=1 // pred_check_branch
      %27 = sbr.rel (0) target = $region29
    $region28: #{tpu_custom_call.1} parent=1 // pred_region
      _
    $region29: #{tpu_custom_call.1} parent=1 // pred_fallthru
      _
    // Predicated region
    $region30: #{tpu_custom_call.1} parent=1 // pred_check
      _
    $region31: #{tpu_custom_call.1} parent=1 // pred_check_branch
      %29 = sbr.rel (0) target = $region33
    $region32: #{tpu_custom_call.1} parent=1 // pred_region
      _
    $region33: #{tpu_custom_call.1} parent=1 // pred_fallthru
      _
    %v31 = vld [vmem:[%s0] sm:$0xff]
    %v32 = vld [vmem:[%s0 + $0x8] sm:$0xff]
    %v33 = vld [vmem:[%s0 + $0x10] sm:$0xff]
    %v34 = vld [vmem:[%s0 + $0x18] sm:$0xff]
    %v35 = vld [vmem:[%s0 + $0x20] sm:$0xff]
    %v36 = vld [vmem:[%s0 + $0x28] sm:$0xff]
    %v37 = vlaneseq
    %v38 = vand.u32 %v37, 127
    %39 = vset.pattern.permute.xlu0 0
    %40 = vperm.xlu0 %39, %v31
    %v41 = vpop.permute.xlu0 %40
    %42 = vset.pattern.permute.xlu0 0
    %43 = vperm.xlu0 %42, %v32
    %v44 = vpop.permute.xlu0 %43
    %45 = vset.pattern.permute.xlu0 0
    %46 = vperm.xlu0 %45, %v33
    %v47 = vpop.permute.xlu0 %46
    %48 = vset.pattern.permute.xlu0 0
    %49 = vperm.xlu0 %48, %v34
    %v50 = vpop.permute.xlu0 %49
    %51 = vset.pattern.permute.xlu0 0
    %52 = vperm.xlu0 %51, %v35
    %v53 = vpop.permute.xlu0 %52
    %54 = vset.pattern.permute.xlu0 0
    %55 = vperm.xlu0 %54, %v36
    %v56 = vpop.permute.xlu0 %55
    %vm57 = vcmp.eq.s32.totalorder %v38, %v41
    %vm58 = vcmp.eq.s32.totalorder %v38, %v44
    %vm59 = vcmp.eq.s32.totalorder %v38, %v47
    %vm60 = vcmp.eq.s32.totalorder %v38, %v50
    %vm61 = vcmp.eq.s32.totalorder %v38, %v53
    %vm62 = vcmp.eq.s32.totalorder %v38, %v56
    %v63 = vsel %vm57, 1.0, 0.0
    %v64 = vsel %vm58, 1.0, 0.0
    %v65 = vsel %vm59, 1.0, 0.0
    %v66 = vsel %vm60, 1.0, 0.0
    %v67 = vsel %vm61, 1.0, 0.0
    %v68 = vsel %vm62, 1.0, 0.0
    %v69 = vpack.c.bf16 %v64, %v63
    %v70 = vpack.c.bf16 %v66, %v65
    %v71 = vpack.c.bf16 %v68, %v67
    %v72 = vld [vmem:[%s1] sm:$0xf]
    %v73 = vld [vmem:[%s1 + $0x4] sm:$0xf]
    %v74 = vld [vmem:[%s1 + $0x8] sm:$0xf]
    %v75 = vld [vmem:[%s1 + $0xc] sm:$0xf]
    %v80 = vunpack.c.l.b16 %v72
    %v81 = vunpack.c.l.b16 %v73
    %v82 = vunpack.c.l.b16 %v74
    %v83 = vunpack.c.l.b16 %v75
    %v84 = vpack.c.b16 %v81, %v80
    %v85 = vpack.c.b16 %v83, %v82
    %vm88 = vcmask 261120
    %v90 = vsel %vm88, %v69, 0
    %v93 = vsel %vm88, %v70, 0
    %v96 = vsel %vm88, %v71, 0
    %98 = vmatprep.subr.bf16.mxu0 0
    %99 = vmatpush1.bf16.msra.mxu0 0
    %100 = vmatprep.subr.bf16.mxu0 0
    %101 = vmatpush1.bf16.msra.mxu0 0
    %102 = vmatprep.subr.bf16.mxu0 0
    %103 = vmatpush1.bf16.msra.mxu0 0
    %104 = vmatprep.subr.bf16.mxu0 0
    %105 = vmatpush1.bf16.msra.mxu0 0
    %106 = vmatprep.subr.bf16.mxu0 0
    %107 = vmatpush1.bf16.msra.mxu0 0
    %108 = vmatprep.subr.bf16.mxu0 0
    %109 = vmatpush1.bf16.msra.mxu0 0
    %110 = vmatprep.subr.bf16.mxu0 0
    %111 = vmatpush1.bf16.msra.mxu0 %v85
    %112 = vmatprep.subr.bf16.mxu0 0
    %113 = vmatpush1.bf16.msra.mxu0 %v84
    %114 = vmatprep.subr.bf16.mxu0 0
    %115 = vmatpush2.bf16.msra.mxu0 0
    %116 = vmatprep.subr.bf16.mxu0 0
    %117 = vmatpush2.bf16.msra.mxu0 0
    %118 = vmatprep.subr.bf16.mxu0 0
    %119 = vmatpush2.bf16.msra.mxu0 0
    %120 = vmatprep.subr.bf16.mxu0 0
    %121 = vmatpush2.bf16.msra.mxu0 0
    %122 = vmatprep.subr.bf16.mxu0 0
    %123 = vmatpush2.bf16.msra.mxu0 0
    %124 = vmatprep.subr.bf16.mxu0 0
    %125 = vmatpush2.bf16.msra.mxu0 0
    %126 = vmatprep.subr.bf16.mxu0 0
    %127 = vmatpush2.bf16.msra.mxu0 0
    %128 = vmatprep.subr.bf16.mxu0 0
    %129 = vmatpush2.bf16.msra.mxu0 0
    %130 = vmatprep.mubr.bf16.mxu0 0
    %131 = vmatmul.mubr.bf16.gmra.mxu0 %v90
    %v132 = vpop.f32.mrf.mxu0
    %v133 = vadd.f32 0.0, %v132
    %v134 = vpop.f32.mrf.mxu0
    %v135 = vpop.f32.mrf.mxu0
    %v136 = vadd.f32 0.0, %v135
    %v137 = vpop.f32.mrf.mxu0
    %138 = vmatprep.mubr.bf16.mxu0 0
    %139 = vmatmul.mubr.bf16.gmra.mxu0 %v93
    %v140 = vpop.f32.mrf.mxu0
    %v141 = vadd.f32 0.0, %v140
    %v142 = vpop.f32.mrf.mxu0
    %v143 = vpop.f32.mrf.mxu0
    %v144 = vadd.f32 0.0, %v143
    %v145 = vpop.f32.mrf.mxu0
    %146 = vmatprep.mubr.bf16.mxu0 0
    %147 = vmatmul.mubr.bf16.gmra.mxu0 %v96
    %v148 = vpop.f32.mrf.mxu0
    %v149 = vadd.f32 0.0, %v148
    %v150 = vpop.f32.mrf.mxu0
    %v151 = vpop.f32.mrf.mxu0
    %v152 = vadd.f32 0.0, %v151
    %v153 = vpop.f32.mrf.mxu0
    %154 = vdwg.mxu0
    %v155 = vpack.c.bf16 %v136, %v133
    %v156 = vpack.c.bf16 %v144, %v141
    %v157 = vpack.c.bf16 %v152, %v149
    %v161 = vcombine.high %v155, %v155
    %v163 = vunpack.c.l.s4 1983009808
    %v164 = vunpack.c.0.s8 %v163
    %v165 = vlaneseq
    %v166 = vshrl.u32 %v165, 7
    %v167 = vsub.s32 %v164, %v166
    %v168 = vrot.slane %v155, %v167
    %v170 = vunpack.c.l.s4 1983009808
    %v171 = vunpack.c.0.s8 %v170
    %v172 = vlaneseq
    %v173 = vshrl.u32 %v172, 7
    %v174 = vsub.s32 %v171, %v173
    %v175 = vrot.slane %v161, %v174
    %v176 = vcombine.high %v168, %v168
    %v177 = vcombine.high %v175, %v175
    %v178 = vcombine.high %v156, %v156
    %v180 = vunpack.c.l.s4 1983009808
    %v181 = vunpack.c.0.s8 %v180
    %v182 = vlaneseq
    %v183 = vshrl.u32 %v182, 7
    %v184 = vsub.s32 %v181, %v183
    %v185 = vrot.slane %v156, %v184
    %v187 = vunpack.c.l.s4 1983009808
    %v188 = vunpack.c.0.s8 %v187
    %v189 = vlaneseq
    %v190 = vshrl.u32 %v189, 7
    %v191 = vsub.s32 %v188, %v190
    %v192 = vrot.slane %v178, %v191
    %v193 = vcombine.high %v185, %v185
    %v194 = vcombine.high %v192, %v192
    %v195 = vcombine.high %v157, %v157
    %v197 = vunpack.c.l.s4 1983009808
    %v198 = vunpack.c.0.s8 %v197
    %v199 = vlaneseq
    %v200 = vshrl.u32 %v199, 7
    %v201 = vsub.s32 %v198, %v200
    %v202 = vrot.slane %v157, %v201
    %v204 = vunpack.c.l.s4 1983009808
    %v205 = vunpack.c.0.s8 %v204
    %v206 = vlaneseq
    %v207 = vshrl.u32 %v206, 7
    %v208 = vsub.s32 %v205, %v207
    %v209 = vrot.slane %v195, %v208
    %v210 = vcombine.high %v202, %v202
    %v211 = vcombine.high %v209, %v209
    %vm212 = vcmask 125952
    %213 = vst.msk [vmem:[#allocation2] sm:$0xf] %vm212, 0
    %214 = vst.msk [vmem:[#allocation2 + $0x4] sm:$0xf] %vm212, 0
    %215 = vst.msk [vmem:[#allocation2 + $0x8] sm:$0xf] %vm212, 0
    %216 = vst.msk [vmem:[#allocation2 + $0xc] sm:$0xf] %vm212, 0
    %217 = vst.msk [vmem:[#allocation2 + $0x10] sm:$0xf] %vm212, 0
    %218 = vst.msk [vmem:[#allocation2 + $0x14] sm:$0xf] %vm212, 0
    %219 = vst.msk [vmem:[#allocation2 + $0x18] sm:$0xf] %vm212, 0
    %220 = vst.msk [vmem:[#allocation2 + $0x1c] sm:$0xf] %vm212, 0
    %v221 = vcombine.low %v168, %v176
    %v223 = vunpack.c.l.s4 1983009808
    %v224 = vunpack.c.0.s8 %v223
    %v225 = vlaneseq
    %v226 = vshrl.u32 %v225, 7
    %v227 = vsub.s32 %v224, %v226
    %v228 = vrot.slane %v221, %v227
    %v230 = vunpack.c.l.s4 1983009808
    %v231 = vunpack.c.0.s8 %v230
    %v232 = vlaneseq
    %v233 = vshrl.u32 %v232, 7
    %v234 = vsub.s32 %v231, %v233
    %v235 = vrot.slane %v175, %v234
    %v236 = vcombine.low %v177, %v185
    %v238 = vunpack.c.l.s4 1983009808
    %v239 = vunpack.c.0.s8 %v238
    %v240 = vlaneseq
    %v241 = vshrl.u32 %v240, 7
    %v242 = vsub.s32 %v239, %v241
    %v243 = vrot.slane %v236, %v242
    %v245 = vunpack.c.l.s4 1983009808
    %v246 = vunpack.c.0.s8 %v245
    %v247 = vlaneseq
    %v248 = vshrl.u32 %v247, 7
    %v249 = vsub.s32 %v246, %v248
    %v250 = vrot.slane %v193, %v249
    %v251 = vcombine.low %v192, %v194
    %v253 = vunpack.c.l.s4 1983009808
    %v254 = vunpack.c.0.s8 %v253
    %v255 = vlaneseq
    %v256 = vshrl.u32 %v255, 7
    %v257 = vsub.s32 %v254, %v256
    %v258 = vrot.slane %v251, %v257
    %v260 = vunpack.c.l.s4 1983009808
    %v261 = vunpack.c.0.s8 %v260
    %v262 = vlaneseq
    %v263 = vshrl.u32 %v262, 7
    %v264 = vsub.s32 %v261, %v263
    %v265 = vrot.slane %v202, %v264
    %v266 = vcombine.low %v210, %v209
    %v268 = vunpack.c.l.s4 1983009808
    %v269 = vunpack.c.0.s8 %v268
    %v270 = vlaneseq
    %v271 = vshrl.u32 %v270, 7
    %v272 = vsub.s32 %v269, %v271
    %v273 = vrot.slane %v266, %v272
    %v275 = vunpack.c.l.s4 1983009808
    %v276 = vunpack.c.0.s8 %v275
    %v277 = vlaneseq
    %v278 = vshrl.u32 %v277, 7
    %v279 = vsub.s32 %v276, %v278
    %v280 = vrot.slane %v211, %v279
    %vm281 = vcmask 1040384
    %vm282 = vcmask 1044484
    %vm283 = vmor %vm281, %vm282
    %v284 = vrot.slane %v228, 7
    %v285 = vrot.slane %v284, 4
    %v286 = vrot.slane %v235, 7
    %v287 = vsel %vm283, %v285, %v286
    %v288 = vrot.slane %v243, 7
    %v289 = vrot.slane %v288, 4
    %v290 = vrot.slane %v250, 7
    %v291 = vsel %vm283, %v289, %v290
    %v292 = vrot.slane %v258, 7
    %v293 = vrot.slane %v292, 4
    %v294 = vrot.slane %v265, 7
    %v295 = vsel %vm283, %v293, %v294
    %v296 = vrot.slane %v273, 7
    %v297 = vrot.slane %v296, 4
    %v298 = vrot.slane %v280, 7
    %v299 = vsel %vm283, %v297, %v298
    %vm308 = vcmask 125953
    %309 = vst.msk [vmem:[#allocation2] sm:$0xe] %vm308, %v284
    %vm310 = vcmask 124928
    %311 = vst.msk [vmem:[#allocation2 + $0x4] sm:$0x7] %vm310, %v287
    %312 = vst.msk [vmem:[#allocation2 + $0x8] sm:$0xe] %vm308, %v288
    %313 = vst.msk [vmem:[#allocation2 + $0xc] sm:$0x7] %vm310, %v291
    %314 = vst.msk [vmem:[#allocation2 + $0x10] sm:$0xe] %vm308, %v292
    %315 = vst.msk [vmem:[#allocation2 + $0x14] sm:$0x7] %vm310, %v295
    %316 = vst.msk [vmem:[#allocation2 + $0x18] sm:$0xe] %vm308, %v296
    %317 = vst.msk [vmem:[#allocation2 + $0x1c] sm:$0x7] %vm310, %v299
    %v318 = vld [vmem:[#allocation2] sm:$0xf]
    %v319 = vld [vmem:[#allocation2 + $0x4] sm:$0xf]
    %v320 = vld [vmem:[#allocation2 + $0x8] sm:$0xf]
    %v321 = vld [vmem:[#allocation2 + $0xc] sm:$0xf]
    %v322 = vld [vmem:[#allocation2 + $0x10] sm:$0xf]
    %v323 = vld [vmem:[#allocation2 + $0x14] sm:$0xf]
    %v324 = vld [vmem:[#allocation2 + $0x18] sm:$0xf]
    %v325 = vld [vmem:[#allocation2 + $0x1c] sm:$0xf]
    %v326 = vld [vmem:[%s2] sm:$0xf]
    %v327 = vld [vmem:[%s2 + $0x4] sm:$0xf]
    %v336 = vunpack.c.l.b16 %v318
    %v337 = vunpack.c.l.b16 %v319
    %v338 = vunpack.c.l.b16 %v320
    %v339 = vunpack.c.l.b16 %v321
    %v340 = vunpack.c.l.b16 %v322
    %v341 = vunpack.c.l.b16 %v323
    %v342 = vunpack.c.l.b16 %v324
    %v343 = vunpack.c.l.b16 %v325
    %v344 = vpack.c.b16 %v337, %v336
    %v345 = vpack.c.b16 %v339, %v338
    %v346 = vpack.c.b16 %v341, %v340
    %v347 = vpack.c.b16 %v343, %v342
    %v350 = vunpack.c.l.b16 %v326
    %v351 = vunpack.c.l.b16 %v327
    %v352 = vpack.c.b16 %v351, %v350
    %vm354 = vcmask 130048
    %v356 = vsel %vm354, %v344, 0
    %v359 = vsel %vm354, %v345, 0
    %v362 = vsel %vm354, %v346, 0
    %v365 = vsel %vm354, %v347, 0
    %367 = vmatprep.subr.bf16.mxu0 0
    %368 = vmatpush1.bf16.msra.mxu0 0
    %369 = vmatprep.subr.bf16.mxu0 0
    %370 = vmatpush1.bf16.msra.mxu0 0
    %371 = vmatprep.subr.bf16.mxu0 0
    %372 = vmatpush1.bf16.msra.mxu0 0
    %373 = vmatprep.subr.bf16.mxu0 0
    %374 = vmatpush1.bf16.msra.mxu0 0
    %375 = vmatprep.subr.bf16.mxu0 0
    %376 = vmatpush1.bf16.msra.mxu0 0
    %377 = vmatprep.subr.bf16.mxu0 0
    %378 = vmatpush1.bf16.msra.mxu0 0
    %379 = vmatprep.subr.bf16.mxu0 0
    %380 = vmatpush1.bf16.msra.mxu0 0
    %381 = vmatprep.subr.bf16.mxu0 0
    %382 = vmatpush1.bf16.msra.mxu0 %v352
    %383 = vmatprep.subr.bf16.mxu0 0
    %384 = vmatpush2.bf16.msra.mxu0 0
    %385 = vmatprep.subr.bf16.mxu0 0
    %386 = vmatpush2.bf16.msra.mxu0 0
    %387 = vmatprep.subr.bf16.mxu0 0
    %388 = vmatpush2.bf16.msra.mxu0 0
    %389 = vmatprep.subr.bf16.mxu0 0
    %390 = vmatpush2.bf16.msra.mxu0 0
    %391 = vmatprep.subr.bf16.mxu0 0
    %392 = vmatpush2.bf16.msra.mxu0 0
    %393 = vmatprep.subr.bf16.mxu0 0
    %394 = vmatpush2.bf16.msra.mxu0 0
    %395 = vmatprep.subr.bf16.mxu0 0
    %396 = vmatpush2.bf16.msra.mxu0 0
    %397 = vmatprep.subr.bf16.mxu0 0
    %398 = vmatpush2.bf16.msra.mxu0 0
    %399 = vmatprep.mubr.bf16.mxu0 0
    %400 = vmatmul.mubr.bf16.gmra.mxu0 %v356
    %v401 = vpop.f32.mrf.mxu0
    %v402 = vadd.f32 0.0, %v401
    %v403 = vpop.f32.mrf.mxu0
    %v404 = vpop.f32.mrf.mxu0
    %v405 = vadd.f32 0.0, %v404
    %v406 = vpop.f32.mrf.mxu0
    %407 = vmatprep.mubr.bf16.mxu0 0
    %408 = vmatmul.mubr.bf16.gmra.mxu0 %v359
    %v409 = vpop.f32.mrf.mxu0
    %v410 = vadd.f32 0.0, %v409
    %v411 = vpop.f32.mrf.mxu0
    %v412 = vpop.f32.mrf.mxu0
    %v413 = vadd.f32 0.0, %v412
    %v414 = vpop.f32.mrf.mxu0
    %415 = vmatprep.mubr.bf16.mxu0 0
    %416 = vmatmul.mubr.bf16.gmra.mxu0 %v362
    %v417 = vpop.f32.mrf.mxu0
    %v418 = vadd.f32 0.0, %v417
    %v419 = vpop.f32.mrf.mxu0
    %v420 = vpop.f32.mrf.mxu0
    %v421 = vadd.f32 0.0, %v420
    %v422 = vpop.f32.mrf.mxu0
    %423 = vmatprep.mubr.bf16.mxu0 0
    %424 = vmatmul.mubr.bf16.gmra.mxu0 %v365
    %v425 = vpop.f32.mrf.mxu0
    %v426 = vadd.f32 0.0, %v425
    %v427 = vpop.f32.mrf.mxu0
    %v428 = vpop.f32.mrf.mxu0
    %v429 = vadd.f32 0.0, %v428
    %v430 = vpop.f32.mrf.mxu0
    %431 = vdwg.mxu0
    %s432 = scalar_lea.vmem %s2, 8
    %v433 = vld [vmem:[%s432] sm:$0xf]
    %v434 = vld [vmem:[%s432 + $0x4] sm:$0xf]
    %v437 = vunpack.c.l.b16 %v433
    %v438 = vunpack.c.l.b16 %v434
    %v439 = vpack.c.b16 %v438, %v437
    %441 = vmatprep.subr.bf16.mxu0 0
    %442 = vmatpush1.bf16.msra.mxu0 0
    %443 = vmatprep.subr.bf16.mxu0 0
    %444 = vmatpush1.bf16.msra.mxu0 0
    %445 = vmatprep.subr.bf16.mxu0 0
    %446 = vmatpush1.bf16.msra.mxu0 0
    %447 = vmatprep.subr.bf16.mxu0 0
    %448 = vmatpush1.bf16.msra.mxu0 0
    %449 = vmatprep.subr.bf16.mxu0 0
    %450 = vmatpush1.bf16.msra.mxu0 0
    %451 = vmatprep.subr.bf16.mxu0 0
    %452 = vmatpush1.bf16.msra.mxu0 0
    %453 = vmatprep.subr.bf16.mxu0 0
    %454 = vmatpush1.bf16.msra.mxu0 0
    %455 = vmatprep.subr.bf16.mxu0 0
    %456 = vmatpush1.bf16.msra.mxu0 %v439
    %457 = vmatprep.subr.bf16.mxu0 0
    %458 = vmatpush2.bf16.msra.mxu0 0
    %459 = vmatprep.subr.bf16.mxu0 0
    %460 = vmatpush2.bf16.msra.mxu0 0
    %461 = vmatprep.subr.bf16.mxu0 0
    %462 = vmatpush2.bf16.msra.mxu0 0
    %463 = vmatprep.subr.bf16.mxu0 0
    %464 = vmatpush2.bf16.msra.mxu0 0
    %465 = vmatprep.subr.bf16.mxu0 0
    %466 = vmatpush2.bf16.msra.mxu0 0
    %467 = vmatprep.subr.bf16.mxu0 0
    %468 = vmatpush2.bf16.msra.mxu0 0
    %469 = vmatprep.subr.bf16.mxu0 0
    %470 = vmatpush2.bf16.msra.mxu0 0
    %471 = vmatprep.subr.bf16.mxu0 0
    %472 = vmatpush2.bf16.msra.mxu0 0
    %473 = vmatprep.mubr.bf16.mxu0 0
    %474 = vmatmul.mubr.bf16.gmra.mxu0 %v356
    %v475 = vpop.f32.mrf.mxu0
    %v476 = vadd.f32 0.0, %v475
    %v477 = vpop.f32.mrf.mxu0
    %v478 = vpop.f32.mrf.mxu0
    %v479 = vadd.f32 0.0, %v478
    %v480 = vpop.f32.mrf.mxu0
    %481 = vmatprep.mubr.bf16.mxu0 0
    %482 = vmatmul.mubr.bf16.gmra.mxu0 %v359
    %v483 = vpop.f32.mrf.mxu0
    %v484 = vadd.f32 0.0, %v483
    %v485 = vpop.f32.mrf.mxu0
    %v486 = vpop.f32.mrf.mxu0
    %v487 = vadd.f32 0.0, %v486
    %v488 = vpop.f32.mrf.mxu0
    %489 = vmatprep.mubr.bf16.mxu0 0
    %490 = vmatmul.mubr.bf16.gmra.mxu0 %v362
    %v491 = vpop.f32.mrf.mxu0
    %v492 = vadd.f32 0.0, %v491
    %v493 = vpop.f32.mrf.mxu0
    %v494 = vpop.f32.mrf.mxu0
    %v495 = vadd.f32 0.0, %v494
    %v496 = vpop.f32.mrf.mxu0
    %497 = vmatprep.mubr.bf16.mxu0 0
    %498 = vmatmul.mubr.bf16.gmra.mxu0 %v365
    %v499 = vpop.f32.mrf.mxu0
    %v500 = vadd.f32 0.0, %v499
    %v501 = vpop.f32.mrf.mxu0
    %v502 = vpop.f32.mrf.mxu0
    %v503 = vadd.f32 0.0, %v502
    %v504 = vpop.f32.mrf.mxu0
    %505 = vdwg.mxu0
    %vm514 = vcmask 1046528
    %v515 = vrot.slane %v476, 1
    %v516 = vrot.slane %v479, 1
    %v517 = vsel %vm514, %v515, %v516
    %v518 = vrot.slane %v484, 1
    %v519 = vrot.slane %v487, 1
    %v520 = vsel %vm514, %v518, %v519
    %v521 = vrot.slane %v492, 1
    %v522 = vrot.slane %v495, 1
    %v523 = vsel %vm514, %v521, %v522
    %v524 = vrot.slane %v500, 1
    %v525 = vrot.slane %v503, 1
    %v526 = vsel %vm514, %v524, %v525
    %v535 = vadd.f32 %v402, %v517
    %v536 = vadd.f32 %v405, %v516
    %v537 = vadd.f32 %v410, %v520
    %v538 = vadd.f32 %v413, %v519
    %v539 = vadd.f32 %v418, %v523
    %v540 = vadd.f32 %v421, %v522
    %v541 = vadd.f32 %v426, %v526
    %v542 = vadd.f32 %v429, %v525
    %v543 = vld [vmem:[%s3] sm:$0x1]
    %v545 = vlaneseq
    %v546 = vshrl.u32 %v545, 7
    %v547 = vsub.s32 0, %v546
    %v548 = vrot.slane %v543, %v547
    %v550 = vadd.f32 %v535, %v548
    %v551 = vadd.f32 %v536, %v548
    %v552 = vadd.f32 %v537, %v548
    %v553 = vadd.f32 %v538, %v548
    %v554 = vadd.f32 %v539, %v548
    %v555 = vadd.f32 %v540, %v548
    %v556 = vadd.f32 %v541, %v548
    %v557 = vadd.f32 %v542, %v548
    %v558 = vmax.f32 %v550, 0.0
    %v559 = vmax.f32 %v551, 0.0
    %v560 = vmax.f32 %v552, 0.0
    %v561 = vmax.f32 %v553, 0.0
    %v562 = vmax.f32 %v554, 0.0
    %v563 = vmax.f32 %v555, 0.0
    %v564 = vmax.f32 %v556, 0.0
    %v565 = vmax.f32 %v557, 0.0
    %vm566 = vcmask 64513
    %v567 = vsel %vm566, %v558, -inf
    %vm568 = vcmask 62464
    %v569 = vsel %vm568, %v559, -inf
    %v570 = vmax.f32 %v567, %v569
    %v571 = vrot.slane %v570, 4
    %v572 = vmax.f32 %v570, %v571
    %v573 = vrot.slane %v572, 2
    %v574 = vmax.f32 %v572, %v573
    %v575 = vrot.slane %v574, 1
    %v576 = vmax.f32 %v574, %v575
    %v577 = vsel %vm566, %v560, -inf
    %v578 = vsel %vm568, %v561, -inf
    %v579 = vmax.f32 %v577, %v578
    %v580 = vrot.slane %v579, 4
    %v581 = vmax.f32 %v579, %v580
    %v582 = vrot.slane %v581, 2
    %v583 = vmax.f32 %v581, %v582
    %v584 = vrot.slane %v583, 1
    %v585 = vmax.f32 %v583, %v584
    %v586 = vsel %vm566, %v562, -inf
    %v587 = vsel %vm568, %v563, -inf
    %v588 = vmax.f32 %v586, %v587
    %v589 = vrot.slane %v588, 4
    %v590 = vmax.f32 %v588, %v589
    %v591 = vrot.slane %v590, 2
    %v592 = vmax.f32 %v590, %v591
    %v593 = vrot.slane %v592, 1
    %v594 = vmax.f32 %v592, %v593
    %v595 = vsel %vm566, %v564, -inf
    %v596 = vsel %vm568, %v565, -inf
    %v597 = vmax.f32 %v595, %v596
    %v598 = vrot.slane %v597, 4
    %v599 = vmax.f32 %v597, %v598
    %v600 = vrot.slane %v599, 2
    %v601 = vmax.f32 %v599, %v600
    %v602 = vrot.slane %v601, 1
    %v603 = vmax.f32 %v601, %v602
    %v604 = vpack.c.bf16 %v576, %v576
    %v605 = vpack.c.bf16 %v585, %v585
    %v606 = vpack.c.bf16 %v594, %v594
    %v607 = vpack.c.bf16 %v603, %v603
    %v608 = vld [vmem:[%s6] sm:$0xf]
    %v609 = vld [vmem:[%s4] sm:$0xf]
    %v610 = vld [vmem:[%s4 + $0x4] sm:$0xf]
    %v613 = vunpack.c.l.b16 %v609
    %v614 = vunpack.c.l.b16 %v610
    %v615 = vpack.c.b16 %v614, %v613
    %617 = vmatprep.subr.bf16.mxu0 0
    %618 = vmatpush1.bf16.msra.mxu0 0
    %619 = vmatprep.subr.bf16.mxu0 0
    %620 = vmatpush1.bf16.msra.mxu0 0
    %621 = vmatprep.subr.bf16.mxu0 0
    %622 = vmatpush1.bf16.msra.mxu0 0
    %623 = vmatprep.subr.bf16.mxu0 0
    %624 = vmatpush1.bf16.msra.mxu0 0
    %625 = vmatprep.subr.bf16.mxu0 0
    %626 = vmatpush1.bf16.msra.mxu0 0
    %627 = vmatprep.subr.bf16.mxu0 0
    %628 = vmatpush1.bf16.msra.mxu0 0
    %629 = vmatprep.subr.bf16.mxu0 0
    %630 = vmatpush1.bf16.msra.mxu0 0
    %631 = vmatprep.subr.bf16.mxu0 0
    %632 = vmatpush1.bf16.msra.mxu0 %v615
    %633 = vmatprep.subr.bf16.mxu0 0
    %634 = vmatpush2.bf16.msra.mxu0 0
    %635 = vmatprep.subr.bf16.mxu0 0
    %636 = vmatpush2.bf16.msra.mxu0 0
    %637 = vmatprep.subr.bf16.mxu0 0
    %638 = vmatpush2.bf16.msra.mxu0 0
    %639 = vmatprep.subr.bf16.mxu0 0
    %640 = vmatpush2.bf16.msra.mxu0 0
    %641 = vmatprep.subr.bf16.mxu0 0
    %642 = vmatpush2.bf16.msra.mxu0 0
    %643 = vmatprep.subr.bf16.mxu0 0
    %644 = vmatpush2.bf16.msra.mxu0 0
    %645 = vmatprep.subr.bf16.mxu0 0
    %646 = vmatpush2.bf16.msra.mxu0 0
    %647 = vmatprep.subr.bf16.mxu0 0
    %648 = vmatpush2.bf16.msra.mxu0 0
    %649 = vmatprep.mubr.bf16.mxu0 0
    %650 = vmatmul.mubr.bf16.gmra.mxu0 %v356
    %v651 = vpop.f32.mrf.mxu0
    %v652 = vadd.f32 0.0, %v651
    %v653 = vpop.f32.mrf.mxu0
    %v654 = vpop.f32.mrf.mxu0
    %v655 = vadd.f32 0.0, %v654
    %v656 = vpop.f32.mrf.mxu0
    %657 = vmatprep.mubr.bf16.mxu0 0
    %658 = vmatmul.mubr.bf16.gmra.mxu0 %v359
    %v659 = vpop.f32.mrf.mxu0
    %v660 = vadd.f32 0.0, %v659
    %v661 = vpop.f32.mrf.mxu0
    %v662 = vpop.f32.mrf.mxu0
    %v663 = vadd.f32 0.0, %v662
    %v664 = vpop.f32.mrf.mxu0
    %665 = vmatprep.mubr.bf16.mxu0 0
    %666 = vmatmul.mubr.bf16.gmra.mxu0 %v362
    %v667 = vpop.f32.mrf.mxu0
    %v668 = vadd.f32 0.0, %v667
    %v669 = vpop.f32.mrf.mxu0
    %v670 = vpop.f32.mrf.mxu0
    %v671 = vadd.f32 0.0, %v670
    %v672 = vpop.f32.mrf.mxu0
    %673 = vmatprep.mubr.bf16.mxu0 0
    %674 = vmatmul.mubr.bf16.gmra.mxu0 %v365
    %v675 = vpop.f32.mrf.mxu0
    %v676 = vadd.f32 0.0, %v675
    %v677 = vpop.f32.mrf.mxu0
    %v678 = vpop.f32.mrf.mxu0
    %v679 = vadd.f32 0.0, %v678
    %v680 = vpop.f32.mrf.mxu0
    %681 = vdwg.mxu0
    %s682 = scalar_lea.vmem %s4, 8
    %v683 = vld [vmem:[%s682] sm:$0xf]
    %v684 = vld [vmem:[%s682 + $0x4] sm:$0xf]
    %v687 = vunpack.c.l.b16 %v683
    %v688 = vunpack.c.l.b16 %v684
    %v689 = vpack.c.b16 %v688, %v687
    %691 = vmatprep.subr.bf16.mxu0 0
    %692 = vmatpush1.bf16.msra.mxu0 0
    %693 = vmatprep.subr.bf16.mxu0 0
    %694 = vmatpush1.bf16.msra.mxu0 0
    %695 = vmatprep.subr.bf16.mxu0 0
    %696 = vmatpush1.bf16.msra.mxu0 0
    %697 = vmatprep.subr.bf16.mxu0 0
    %698 = vmatpush1.bf16.msra.mxu0 0
    %699 = vmatprep.subr.bf16.mxu0 0
    %700 = vmatpush1.bf16.msra.mxu0 0
    %701 = vmatprep.subr.bf16.mxu0 0
    %702 = vmatpush1.bf16.msra.mxu0 0
    %703 = vmatprep.subr.bf16.mxu0 0
    %704 = vmatpush1.bf16.msra.mxu0 0
    %705 = vmatprep.subr.bf16.mxu0 0
    %706 = vmatpush1.bf16.msra.mxu0 %v689
    %707 = vmatprep.subr.bf16.mxu0 0
    %708 = vmatpush2.bf16.msra.mxu0 0
    %709 = vmatprep.subr.bf16.mxu0 0
    %710 = vmatpush2.bf16.msra.mxu0 0
    %711 = vmatprep.subr.bf16.mxu0 0
    %712 = vmatpush2.bf16.msra.mxu0 0
    %713 = vmatprep.subr.bf16.mxu0 0
    %714 = vmatpush2.bf16.msra.mxu0 0
    %715 = vmatprep.subr.bf16.mxu0 0
    %716 = vmatpush2.bf16.msra.mxu0 0
    %717 = vmatprep.subr.bf16.mxu0 0
    %718 = vmatpush2.bf16.msra.mxu0 0
    %719 = vmatprep.subr.bf16.mxu0 0
    %720 = vmatpush2.bf16.msra.mxu0 0
    %721 = vmatprep.subr.bf16.mxu0 0
    %722 = vmatpush2.bf16.msra.mxu0 0
    %723 = vmatprep.mubr.bf16.mxu0 0
    %724 = vmatmul.mubr.bf16.gmra.mxu0 %v356
    %v725 = vpop.f32.mrf.mxu0
    %v726 = vadd.f32 0.0, %v725
    %v727 = vpop.f32.mrf.mxu0
    %v728 = vpop.f32.mrf.mxu0
    %v729 = vadd.f32 0.0, %v728
    %v730 = vpop.f32.mrf.mxu0
    %731 = vmatprep.mubr.bf16.mxu0 0
    %732 = vmatmul.mubr.bf16.gmra.mxu0 %v359
    %v733 = vpop.f32.mrf.mxu0
    %v734 = vadd.f32 0.0, %v733
    %v735 = vpop.f32.mrf.mxu0
    %v736 = vpop.f32.mrf.mxu0
    %v737 = vadd.f32 0.0, %v736
    %v738 = vpop.f32.mrf.mxu0
    %739 = vmatprep.mubr.bf16.mxu0 0
    %740 = vmatmul.mubr.bf16.gmra.mxu0 %v362
    %v741 = vpop.f32.mrf.mxu0
    %v742 = vadd.f32 0.0, %v741
    %v743 = vpop.f32.mrf.mxu0
    %v744 = vpop.f32.mrf.mxu0
    %v745 = vadd.f32 0.0, %v744
    %v746 = vpop.f32.mrf.mxu0
    %747 = vmatprep.mubr.bf16.mxu0 0
    %748 = vmatmul.mubr.bf16.gmra.mxu0 %v365
    %v749 = vpop.f32.mrf.mxu0
    %v750 = vadd.f32 0.0, %v749
    %v751 = vpop.f32.mrf.mxu0
    %v752 = vpop.f32.mrf.mxu0
    %v753 = vadd.f32 0.0, %v752
    %v754 = vpop.f32.mrf.mxu0
    %755 = vdwg.mxu0
    %v764 = vrot.slane %v726, 1
    %v765 = vrot.slane %v729, 1
    %v766 = vsel %vm514, %v764, %v765
    %v767 = vrot.slane %v734, 1
    %v768 = vrot.slane %v737, 1
    %v769 = vsel %vm514, %v767, %v768
    %v770 = vrot.slane %v742, 1
    %v771 = vrot.slane %v745, 1
    %v772 = vsel %vm514, %v770, %v771
    %v773 = vrot.slane %v750, 1
    %v774 = vrot.slane %v753, 1
    %v775 = vsel %vm514, %v773, %v774
    %v784 = vadd.f32 %v652, %v766
    %v785 = vadd.f32 %v655, %v765
    %v786 = vadd.f32 %v660, %v769
    %v787 = vadd.f32 %v663, %v768
    %v788 = vadd.f32 %v668, %v772
    %v789 = vadd.f32 %v671, %v771
    %v790 = vadd.f32 %v676, %v775
    %v791 = vadd.f32 %v679, %v774
    %s792 = scalar_lea.vmem %s4, 16
    %v793 = vld [vmem:[%s792] sm:$0xf]
    %v794 = vld [vmem:[%s792 + $0x4] sm:$0xf]
    %v797 = vunpack.c.l.b16 %v793
    %v798 = vunpack.c.l.b16 %v794
    %v799 = vpack.c.b16 %v798, %v797
    %801 = vmatprep.subr.bf16.mxu0 0
    %802 = vmatpush1.bf16.msra.mxu0 0
    %803 = vmatprep.subr.bf16.mxu0 0
    %804 = vmatpush1.bf16.msra.mxu0 0
    %805 = vmatprep.subr.bf16.mxu0 0
    %806 = vmatpush1.bf16.msra.mxu0 0
    %807 = vmatprep.subr.bf16.mxu0 0
    %808 = vmatpush1.bf16.msra.mxu0 0
    %809 = vmatprep.subr.bf16.mxu0 0
    %810 = vmatpush1.bf16.msra.mxu0 0
    %811 = vmatprep.subr.bf16.mxu0 0
    %812 = vmatpush1.bf16.msra.mxu0 0
    %813 = vmatprep.subr.bf16.mxu0 0
    %814 = vmatpush1.bf16.msra.mxu0 0
    %815 = vmatprep.subr.bf16.mxu0 0
    %816 = vmatpush1.bf16.msra.mxu0 %v799
    %817 = vmatprep.subr.bf16.mxu0 0
    %818 = vmatpush2.bf16.msra.mxu0 0
    %819 = vmatprep.subr.bf16.mxu0 0
    %820 = vmatpush2.bf16.msra.mxu0 0
    %821 = vmatprep.subr.bf16.mxu0 0
    %822 = vmatpush2.bf16.msra.mxu0 0
    %823 = vmatprep.subr.bf16.mxu0 0
    %824 = vmatpush2.bf16.msra.mxu0 0
    %825 = vmatprep.subr.bf16.mxu0 0
    %826 = vmatpush2.bf16.msra.mxu0 0
    %827 = vmatprep.subr.bf16.mxu0 0
    %828 = vmatpush2.bf16.msra.mxu0 0
    %829 = vmatprep.subr.bf16.mxu0 0
    %830 = vmatpush2.bf16.msra.mxu0 0
    %831 = vmatprep.subr.bf16.mxu0 0
    %832 = vmatpush2.bf16.msra.mxu0 0
    %833 = vmatprep.mubr.bf16.mxu0 0
    %834 = vmatmul.mubr.bf16.gmra.mxu0 %v356
    %v835 = vpop.f32.mrf.mxu0
    %v836 = vadd.f32 0.0, %v835
    %v837 = vpop.f32.mrf.mxu0
    %v838 = vpop.f32.mrf.mxu0
    %v839 = vadd.f32 0.0, %v838
    %v840 = vpop.f32.mrf.mxu0
    %841 = vmatprep.mubr.bf16.mxu0 0
    %842 = vmatmul.mubr.bf16.gmra.mxu0 %v359
    %v843 = vpop.f32.mrf.mxu0
    %v844 = vadd.f32 0.0, %v843
    %v845 = vpop.f32.mrf.mxu0
    %v846 = vpop.f32.mrf.mxu0
    %v847 = vadd.f32 0.0, %v846
    %v848 = vpop.f32.mrf.mxu0
    %849 = vmatprep.mubr.bf16.mxu0 0
    %850 = vmatmul.mubr.bf16.gmra.mxu0 %v362
    %v851 = vpop.f32.mrf.mxu0
    %v852 = vadd.f32 0.0, %v851
    %v853 = vpop.f32.mrf.mxu0
    %v854 = vpop.f32.mrf.mxu0
    %v855 = vadd.f32 0.0, %v854
    %v856 = vpop.f32.mrf.mxu0
    %857 = vmatprep.mubr.bf16.mxu0 0
    %858 = vmatmul.mubr.bf16.gmra.mxu0 %v365
    %v859 = vpop.f32.mrf.mxu0
    %v860 = vadd.f32 0.0, %v859
    %v861 = vpop.f32.mrf.mxu0
    %v862 = vpop.f32.mrf.mxu0
    %v863 = vadd.f32 0.0, %v862
    %v864 = vpop.f32.mrf.mxu0
    %865 = vdwg.mxu0
    %vm874 = vcmask 1045504
    %v875 = vrot.slane %v836, 2
    %v876 = vrot.slane %v839, 2
    %v877 = vsel %vm874, %v875, %v876
    %v878 = vrot.slane %v844, 2
    %v879 = vrot.slane %v847, 2
    %v880 = vsel %vm874, %v878, %v879
    %v881 = vrot.slane %v852, 2
    %v882 = vrot.slane %v855, 2
    %v883 = vsel %vm874, %v881, %v882
    %v884 = vrot.slane %v860, 2
    %v885 = vrot.slane %v863, 2
    %v886 = vsel %vm874, %v884, %v885
    %v895 = vadd.f32 %v784, %v877
    %v896 = vadd.f32 %v785, %v876
    %v897 = vadd.f32 %v786, %v880
    %v898 = vadd.f32 %v787, %v879
    %v899 = vadd.f32 %v788, %v883
    %v900 = vadd.f32 %v789, %v882
    %v901 = vadd.f32 %v790, %v886
    %v902 = vadd.f32 %v791, %v885
    %v903 = vld [vmem:[%s5] sm:$0x1]
    %v905 = vlaneseq
    %v906 = vshrl.u32 %v905, 7
    %v907 = vsub.s32 0, %v906
    %v908 = vrot.slane %v903, %v907
    %v910 = vadd.f32 %v895, %v908
    %v911 = vadd.f32 %v896, %v908
    %v912 = vadd.f32 %v897, %v908
    %v913 = vadd.f32 %v898, %v908
    %v914 = vadd.f32 %v899, %v908
    %v915 = vadd.f32 %v900, %v908
    %v916 = vadd.f32 %v901, %v908
    %v917 = vadd.f32 %v902, %v908
    %v918 = vmax.f32 %v910, 0.0
    %v919 = vmax.f32 %v911, 0.0
    %v920 = vmax.f32 %v912, 0.0
    %v921 = vmax.f32 %v913, 0.0
    %v922 = vmax.f32 %v914, 0.0
    %v923 = vmax.f32 %v915, 0.0
    %v924 = vmax.f32 %v916, 0.0
    %v925 = vmax.f32 %v917, 0.0
    %vm926 = vcmask 64512
    %v927 = vsel %vm926, %v918, -inf
    %v928 = vsel %vm568, %v919, -inf
    %v929 = vmax.f32 %v927, %v928
    %v930 = vrot.slane %v929, 4
    %v931 = vmax.f32 %v929, %v930
    %v932 = vrot.slane %v931, 2
    %v933 = vmax.f32 %v931, %v932
    %v934 = vrot.slane %v933, 1
    %v935 = vmax.f32 %v933, %v934
    %v936 = vsel %vm926, %v920, -inf
    %v937 = vsel %vm568, %v921, -inf
    %v938 = vmax.f32 %v936, %v937
    %v939 = vrot.slane %v938, 4
    %v940 = vmax.f32 %v938, %v939
    %v941 = vrot.slane %v940, 2
    %v942 = vmax.f32 %v940, %v941
    %v943 = vrot.slane %v942, 1
    %v944 = vmax.f32 %v942, %v943
    %v945 = vsel %vm926, %v922, -inf
    %v946 = vsel %vm568, %v923, -inf
    %v947 = vmax.f32 %v945, %v946
    %v948 = vrot.slane %v947, 4
    %v949 = vmax.f32 %v947, %v948
    %v950 = vrot.slane %v949, 2
    %v951 = vmax.f32 %v949, %v950
    %v952 = vrot.slane %v951, 1
    %v953 = vmax.f32 %v951, %v952
    %v954 = vsel %vm926, %v924, -inf
    %v955 = vsel %vm568, %v925, -inf
    %v956 = vmax.f32 %v954, %v955
    %v957 = vrot.slane %v956, 4
    %v958 = vmax.f32 %v956, %v957
    %v959 = vrot.slane %v958, 2
    %v960 = vmax.f32 %v958, %v959
    %v961 = vrot.slane %v960, 1
    %v962 = vmax.f32 %v960, %v961
    %v963 = vpack.c.bf16 %v935, %v935
    %v964 = vpack.c.bf16 %v944, %v944
    %v965 = vpack.c.bf16 %v953, %v953
    %v966 = vpack.c.bf16 %v962, %v962
    %v967 = vld [vmem:[%s6 + $0x4] sm:$0xf]
    %v972 = vunpack.c.l.b16 %v963
    %v973 = vunpack.c.l.b16 %v964
    %v974 = vunpack.c.l.b16 %v965
    %v975 = vunpack.c.l.b16 %v966
    %vm976 = vcmask 1041409
    %v977 = vsel %vm976, %v973, %v972
    %vm978 = vcmask 1042434
    %v979 = vsel %vm978, %v974, %v977
    %vm980 = vcmask 1043459
    %v981 = vsel %vm980, %v975, %v979
    %v982 = vpack.c.b16 %v981, %v981
    %v984 = vsel %vm926, %v982, 0
    %vm986 = vcmask 1043456
    %v988 = vsel %vm986, %v967, 0
    %990 = vmatprep.subr.bf16.mxu0 0
    %991 = vmatpush1.bf16.msra.mxu0 0
    %992 = vmatprep.subr.bf16.mxu0 0
    %993 = vmatpush1.bf16.msra.mxu0 0
    %994 = vmatprep.subr.bf16.mxu0 0
    %995 = vmatpush1.bf16.msra.mxu0 0
    %996 = vmatprep.subr.bf16.mxu0 0
    %997 = vmatpush1.bf16.msra.mxu0 0
    %998 = vmatprep.subr.bf16.mxu0 0
    %999 = vmatpush1.bf16.msra.mxu0 0
    %1000 = vmatprep.subr.bf16.mxu0 0
    %1001 = vmatpush1.bf16.msra.mxu0 0
    %1002 = vmatprep.subr.bf16.mxu0 0
    %1003 = vmatpush1.bf16.msra.mxu0 0
    %1004 = vmatprep.subr.bf16.mxu0 0
    %1005 = vmatpush1.bf16.msra.mxu0 %v988
    %1006 = vmatprep.subr.bf16.mxu0 0
    %1007 = vmatpush2.bf16.msra.mxu0 0
    %1008 = vmatprep.subr.bf16.mxu0 0
    %1009 = vmatpush2.bf16.msra.mxu0 0
    %1010 = vmatprep.subr.bf16.mxu0 0
    %1011 = vmatpush2.bf16.msra.mxu0 0
    %1012 = vmatprep.subr.bf16.mxu0 0
    %1013 = vmatpush2.bf16.msra.mxu0 0
    %1014 = vmatprep.subr.bf16.mxu0 0
    %1015 = vmatpush2.bf16.msra.mxu0 0
    %1016 = vmatprep.subr.bf16.mxu0 0
    %1017 = vmatpush2.bf16.msra.mxu0 0
    %1018 = vmatprep.subr.bf16.mxu0 0
    %1019 = vmatpush2.bf16.msra.mxu0 0
    %1020 = vmatprep.subr.bf16.mxu0 0
    %1021 = vmatpush2.bf16.msra.mxu0 0
    %1022 = vmatprep.mubr.bf16.mxu0 0
    %1023 = vmatmul.mubr.bf16.gmra.mxu0 %v984
    %v1024 = vpop.f32.mrf.mxu0
    %v1025 = vadd.f32 0.0, %v1024
    %v1026 = vpop.f32.mrf.mxu0
    %v1027 = vpop.f32.mrf.mxu0
    %v1028 = vpop.f32.mrf.mxu0
    %1029 = vdwg.mxu0
    %v1034 = vunpack.c.l.b16 %v604
    %v1035 = vunpack.c.l.b16 %v605
    %v1036 = vunpack.c.l.b16 %v606
    %v1037 = vunpack.c.l.b16 %v607
    %v1038 = vsel %vm976, %v1035, %v1034
    %v1039 = vsel %vm978, %v1036, %v1038
    %v1040 = vsel %vm980, %v1037, %v1039
    %v1041 = vpack.c.b16 %v1040, %v1040
    %v1043 = vsel %vm926, %v1041, 0
    %v1046 = vsel %vm986, %v608, 0
    %1048 = vmatprep.subr.bf16.mxu0 0
    %1049 = vmatpush1.bf16.msra.mxu0 0
    %1050 = vmatprep.subr.bf16.mxu0 0
    %1051 = vmatpush1.bf16.msra.mxu0 0
    %1052 = vmatprep.subr.bf16.mxu0 0
    %1053 = vmatpush1.bf16.msra.mxu0 0
    %1054 = vmatprep.subr.bf16.mxu0 0
    %1055 = vmatpush1.bf16.msra.mxu0 0
    %1056 = vmatprep.subr.bf16.mxu0 0
    %1057 = vmatpush1.bf16.msra.mxu0 0
    %1058 = vmatprep.subr.bf16.mxu0 0
    %1059 = vmatpush1.bf16.msra.mxu0 0
    %1060 = vmatprep.subr.bf16.mxu0 0
    %1061 = vmatpush1.bf16.msra.mxu0 0
    %1062 = vmatprep.subr.bf16.mxu0 0
    %1063 = vmatpush1.bf16.msra.mxu0 %v1046
    %1064 = vmatprep.subr.bf16.mxu0 0
    %1065 = vmatpush2.bf16.msra.mxu0 0
    %1066 = vmatprep.subr.bf16.mxu0 0
    %1067 = vmatpush2.bf16.msra.mxu0 0
    %1068 = vmatprep.subr.bf16.mxu0 0
    %1069 = vmatpush2.bf16.msra.mxu0 0
    %1070 = vmatprep.subr.bf16.mxu0 0
    %1071 = vmatpush2.bf16.msra.mxu0 0
    %1072 = vmatprep.subr.bf16.mxu0 0
    %1073 = vmatpush2.bf16.msra.mxu0 0
    %1074 = vmatprep.subr.bf16.mxu0 0
    %1075 = vmatpush2.bf16.msra.mxu0 0
    %1076 = vmatprep.subr.bf16.mxu0 0
    %1077 = vmatpush2.bf16.msra.mxu0 0
    %1078 = vmatprep.subr.bf16.mxu0 0
    %1079 = vmatpush2.bf16.msra.mxu0 0
    %1080 = vmatprep.mubr.bf16.mxu0 0
    %1081 = vmatmul.mubr.bf16.gmra.mxu0 %v1043
    %v1082 = vpop.f32.mrf.mxu0
    %v1083 = vadd.f32 %v1025, %v1082
    %v1084 = vpop.f32.mrf.mxu0
    %v1085 = vpop.f32.mrf.mxu0
    %v1086 = vpop.f32.mrf.mxu0
    %1087 = vdwg.mxu0
    %v1088 = vld [vmem:[%s7] sm:$0x1]
    %v1090 = vlaneseq
    %v1091 = vshrl.u32 %v1090, 7
    %v1092 = vsub.s32 0, %v1091
    %v1093 = vrot.slane %v1088, %v1092
    %v1095 = vadd.f32 %v1083, %v1093
    %v1096 = vtanh.pop %v1095
    %1097 = vst.msk [vmem:[#allocation3] sm:$0xf] %vm212, %v1096
    // Predicated region
    $region34: #{tpu_custom_call.1} parent=1 // pred_check
      _
    $region35: #{tpu_custom_call.1} parent=1 // pred_check_branch
      %1099 = sbr.rel (0) target = $region37
    $region36: #{tpu_custom_call.1} parent=1 // pred_region
      %s1101 = ssub.s32 64, 64
      %1102 = vsyncadd [#allocation4], %s1101
      %s1104 = sshll.u32 [#allocation3], 4
      %s1105 = int_to_ptr.vmem [resolvable:$true] %s1104
      %1107 = dma.vmem_to_hbm [thread:$0]  %s1105, 64, %s8, [#allocation4]
    $region37: #{tpu_custom_call.1} parent=1 // pred_fallthru
      _
    // Predicated region
    $region38: #{tpu_custom_call.1} parent=1 // pred_check
      _
    $region39: #{tpu_custom_call.1} parent=1 // pred_check_branch
      %1109 = sbr.rel (0) target = $region41
    $region40: #{tpu_custom_call.1} parent=1 // pred_region
      %1110 = dma.done [#allocation4], 64
    $region41: #{tpu_custom_call.1} parent=1 // pred_fallthru
      _
    %1111 = vsyncpa [#allocation4], 1

</llo_original>
